<compile_context>
chip_gen: v6e
topology: v6e:2x2x1
jax: 0.10.0
libtpu: 0.0.40
codegen_flags: <defaults>
</compile_context>

<pallas_src>
import functools

import jax
import jax.numpy as jnp
from jax.experimental import pallas as pl
from jax.experimental.pallas import tpu as pltpu


# ---------------------------------------------------------------------------
# Kernels
# ---------------------------------------------------------------------------

def _layerscale_kernel(x_ref, g_ref, b_ref, o_ref, *, eps, feat_dim):
    """Plain layout: one logical row per sublane row.  x_ref: (TILE, D)."""
    x = x_ref[...].astype(jnp.float32)
    mean = jnp.mean(x, axis=-1, keepdims=True)            # XLU cross-lane reduce
    diff = x - mean
    var = jnp.sum(diff * diff, axis=-1, keepdims=True) * jnp.float32(1.0 / (feat_dim - 1))
    # Exact per-row divide on the (TILE, 1) column; parity with torch.
    inv = 1.0 / (jnp.sqrt(var) + jnp.float32(eps))
    o_ref[...] = (g_ref[...] * (diff * inv) + b_ref[...]).astype(o_ref.dtype)


def _layerscale_packed_kernel(x_ref, g_ref, b_ref, fold_ref, spread_ref, o_ref,
                              *, eps, feat_dim):
    """Lane-dense layout: pack = L // feat_dim logical rows per physical row.

    x_ref: (TILE, L) with L = pack * feat_dim (a multiple of 128).
    fold_ref: (L, pack) block-ones; spread_ref: (pack, L) block-ones.
    Segmented per-logical-row reductions run as small matmuls on the MXU,
    keeping the VPU free and every store unmasked/lane-dense.
    """
    x = x_ref[...].astype(jnp.float32)
    fold = fold_ref[...]
    spread = spread_ref[...]
    s1 = jnp.dot(x, fold, preferred_element_type=jnp.float32)            # (TILE, pack)
    mean = s1 * jnp.float32(1.0 / feat_dim)
    mean_b = jnp.dot(mean, spread, preferred_element_type=jnp.float32)   # (TILE, L)
    diff = x - mean_b                                                    # two-pass: exact
    s2 = jnp.dot(diff * diff, fold, preferred_element_type=jnp.float32)  # (TILE, pack)
    std = jnp.sqrt(s2 * jnp.float32(1.0 / (feat_dim - 1)))
    inv = 1.0 / (std + jnp.float32(eps))                                 # (TILE, pack)
    inv_b = jnp.dot(inv, spread, preferred_element_type=jnp.float32)     # (TILE, L)
    o_ref[...] = (g_ref[...] * (diff * inv_b) + b_ref[...]).astype(o_ref.dtype)


# ---------------------------------------------------------------------------
# Tiling / VMEM budgeting
# ---------------------------------------------------------------------------

def _vmem_capacity_bytes():
    """Per-TensorCore VMEM capacity; conservative fallback (v7x = 64 MiB/TC)."""
    try:
        info = pltpu.get_tpu_info()
        cap = getattr(info, "vmem_capacity_bytes", None)
        if cap:
            return int(cap)
    except Exception:
        pass
    return 64 * 1024 * 1024


def _per_row_bytes(lane_width, in_dtype, out_dtype):
    in_sz = jnp.dtype(in_dtype).itemsize
    out_sz = jnp.dtype(out_dtype).itemsize
    pipelined = lane_width * 2 * (in_sz + out_sz)   # double-buffered in + out tiles
    scratch = lane_width * 4 * 3                    # ~3 tile-sized f32 intermediates
    return pipelined + scratch, lane_width * in_sz


def _pick_tile_rows(rows, lane_width, in_dtype, out_dtype, vmem_cap):
    per_row_total, per_row_x = _per_row_bytes(lane_width, in_dtype, out_dtype)
    budget = vmem_cap // 3                        # headroom for pipeline + compiler
    t_budget = max(1, budget // per_row_total)
    t_data = max(1, (4 * 1024 * 1024) // per_row_x)   # ~4 MiB of x per grid step
    t = min(t_budget, t_data)
    if t >= rows:
        return rows                               # single block covering the full array
    sublane = 16 if jnp.dtype(in_dtype).itemsize == 2 else 8
    t = max(sublane, (t // sublane) * sublane)
    return min(t, rows)


# ---------------------------------------------------------------------------
# Wrapper
# ---------------------------------------------------------------------------

def layer_scale(x, gamma, beta, *, eps=1e-5, tile_rows=None):
    """x: (B, N, D); gamma, beta: (D,). Returns (B, N, D)."""
    B, N, D = x.shape
    assert D >= 2, "feature dim must be >= 2 for the unbiased std (divisor D-1)"
    rows = B * N
    out_dtype = x.dtype

    # Lane-dense packing: fold `pack` logical rows into the 128 lanes when D is
    # a small divisor of 128 and the row count allows a pure reshape.
    pack = 1
    if D < 128 and 128 % D == 0:
        g = 128 // D
        if rows % g == 0:
            pack = g
    lane_width = D * pack
    rows_k = rows // pack

    vmem_cap = _vmem_capacity_bytes()
    if tile_rows is None:
        tile_rows = _pick_tile_rows(rows_k, lane_width, x.dtype, out_dtype, vmem_cap)
    tile_rows = int(min(tile_rows, rows_k))
    grid = pl.cdiv(rows_k, tile_rows)             # partial last block: masked by Pallas

    x2 = x.reshape(rows_k, lane_width)            # contiguous reshape: no data movement

    # Per-feature params cast/tile once in the wrapper; DMA'd once (constant index_map).
    g2 = gamma.astype(jnp.float32)
    b2 = beta.astype(jnp.float32)
    if pack > 1:
        g2 = jnp.tile(g2, pack)
        b2 = jnp.tile(b2, pack)
    g2 = g2.reshape(1, lane_width)
    b2 = b2.reshape(1, lane_width)

    in_sz = jnp.dtype(x.dtype).itemsize
    cost = pl.CostEstimate(
        flops=10 * rows * D,
        transcendentals=rows,                                  # one sqrt per row
        bytes_accessed=rows * D * (in_sz + jnp.dtype(out_dtype).itemsize),
    )

    per_row_total, _ = _per_row_bytes(lane_width, x.dtype, out_dtype)
    footprint = tile_rows * per_row_total + 8 * lane_width * 4
    vmem_limit = int(min(vmem_cap * 3 // 4, max(32 * 1024 * 1024, 2 * footprint)))
    cparams = pltpu.CompilerParams(
        dimension_semantics=("parallel",),   # shards the 1-D row grid across TCs (v7x)
        vmem_limit_bytes=vmem_limit,
    )

    row_spec = pl.BlockSpec((tile_rows, lane_width), lambda i: (i, 0))
    const_spec = pl.BlockSpec((1, lane_width), lambda i: (0, 0))

    if pack > 1:
        seg = jnp.arange(lane_width, dtype=jnp.int32) // D
        fold = (seg[:, None] == jnp.arange(pack, dtype=jnp.int32)[None, :]).astype(jnp.float32)
        spread = fold.T
        kernel = functools.partial(_layerscale_packed_kernel, eps=eps, feat_dim=D)
        in_specs = [
            row_spec, const_spec, const_spec,
            pl.BlockSpec((lane_width, pack), lambda i: (0, 0)),
            pl.BlockSpec((pack, lane_width), lambda i: (0, 0)),
        ]
        args = (x2, g2, b2, fold, spread)
    else:
        # TODO(synk): D not a multiple of 128 and not a divisor of 128 still uses
        # masked partial stores on the lane axis; acceptable for such shapes.
        kernel = functools.partial(_layerscale_kernel, eps=eps, feat_dim=D)
        in_specs = [row_spec, const_spec, const_spec]
        args = (x2, g2, b2)

    out2 = pl.pallas_call(
        kernel,
        out_shape=jax.ShapeDtypeStruct((rows_k, lane_width), out_dtype),
        grid_spec=pltpu.PrefetchScalarGridSpec(
            num_scalar_prefetch=0,
            grid=(grid,),
            in_specs=in_specs,
            out_specs=row_spec,
        ),
        compiler_params=cparams,
        cost_estimate=cost,
    )(*args)

    return out2.reshape(B, N, D)


# ---------------------------------------------------------------------------
# Reference + tests
# ---------------------------------------------------------------------------

def _reference(x, gamma, beta, eps):
    x = x.astype(jnp.float32)
    mean = jnp.mean(x, axis=-1, keepdims=True)
    D = x.shape[-1]
    std = jnp.sqrt(jnp.sum((x - mean) ** 2, axis=-1, keepdims=True) / (D - 1))
    return gamma.astype(jnp.float32) * (x - mean) / (std + eps) + beta.astype(jnp.float32)


if __name__ == "__main__":
    root = jax.random.PRNGKey(0)
    k0, k1, k2, k3 = jax.random.split(root, 4)
    eps = 1e-5

    # 1) Main shape implied by forward: (B, N, D), small D -> lane-dense packed path.
    B, N, D = 2, 8, 32
    x = jax.random.normal(k0, (B, N, D), dtype=jnp.float32)
    gamma = jnp.ones((D,), dtype=jnp.float32)
    beta = jnp.zeros((D,), dtype=jnp.float32)
    out = jax.block_until_ready(layer_scale(x, gamma, beta, eps=eps))
    ref = _reference(x, gamma, beta, eps)
    assert jnp.allclose(out, ref, atol=1e-5, rtol=1e-5), "mismatch (packed path)"

    # 2) Rows not packable (rows % (128//D) != 0): plain path, single full block.
    x2 = jax.random.normal(k1, (1, 5, 32), dtype=jnp.float32)
    g2 = 0.5 + 0.01 * jnp.arange(32, dtype=jnp.float32)
    b2 = 0.1 * jnp.ones((32,), dtype=jnp.float32)
    out2 = jax.block_until_ready(layer_scale(x2, g2, b2, eps=eps))
    ref2 = _reference(x2, g2, b2, eps)
    assert jnp.allclose(out2, ref2, atol=1e-5, rtol=1e-5), "mismatch (plain, small)"

    # 3) D = 128, rows not a multiple of the tile: exercises the masked partial
    #    final block (no explicit padding) across a multi-step grid.
    x3 = jax.random.normal(k2, (2, 10, 128), dtype=jnp.float32)
    g3 = jnp.ones((128,), dtype=jnp.float32)
    b3 = jnp.zeros((128,), dtype=jnp.float32)
    out3 = jax.block_until_ready(layer_scale(x3, g3, b3, eps=eps, tile_rows=8))
    ref3 = _reference(x3, g3, b3, eps)
    assert jnp.allclose(out3, ref3, atol=1e-5, rtol=1e-5), "mismatch (partial tail)"

    # 4) bf16 input, packed path with a multi-step grid.
    x4 = jax.random.normal(k3, (2, 32, 32), dtype=jnp.float32).astype(jnp.bfloat16)
    g4 = jnp.ones((32,), dtype=jnp.bfloat16)
    b4 = jnp.zeros((32,), dtype=jnp.bfloat16)
    out4 = jax.block_until_ready(layer_scale(x4, g4, b4, eps=eps, tile_rows=8))
    ref4 = _reference(x4, g4, b4, eps)
    assert jnp.allclose(out4.astype(jnp.float32), ref4, atol=5e-2, rtol=5e-2), "mismatch (bf16)"

    print("KERNEL_OK")
</pallas_src>

<mosaic_0001>
module attributes {stable_mosaic.version = 11 : i64} {
  func.func @_layerscale_packed_kernel(%arg0: i32, %arg1: memref<4x128xf32, #tpu.memory_space<vmem>>, %arg2: memref<1x128xf32, #tpu.memory_space<vmem>>, %arg3: memref<1x128xf32, #tpu.memory_space<vmem>>, %arg4: memref<128x4xf32, #tpu.memory_space<vmem>>, %arg5: memref<4x128xf32, #tpu.memory_space<vmem>>, %arg6: memref<4x128xf32, #tpu.memory_space<vmem>>) attributes {dimension_semantics = [#tpu.dimension_semantics<parallel>], iteration_bounds = array<i64: 1>, scalar_prefetch = 0 : i64, scratch_operands = 0 : i64, tpu.core_type = #tpu.core_type<tc>, window_params = [{transform_indices = @transform_0, window_bounds = array<i64: 4, 128>}, {pipeline_mode = #tpu.pipeline_mode<synchronous>, transform_indices = @transform_1, window_bounds = array<i64: 1, 128>}, {pipeline_mode = #tpu.pipeline_mode<synchronous>, transform_indices = @transform_2, window_bounds = array<i64: 1, 128>}, {pipeline_mode = #tpu.pipeline_mode<synchronous>, transform_indices = @transform_3, window_bounds = array<i64: 128, 4>}, {pipeline_mode = #tpu.pipeline_mode<synchronous>, transform_indices = @transform_4, window_bounds = array<i64: 4, 128>}, {transform_indices = @transform_5, window_bounds = array<i64: 4, 128>}]} {
    %c0 = arith.constant 0 : index
    %c0_0 = arith.constant 0 : index
    %0 = vector.load %arg1[%c0, %c0_0] : memref<4x128xf32, #tpu.memory_space<vmem>>, vector<4x128xf32>
    %c0_1 = arith.constant 0 : index
    %c0_2 = arith.constant 0 : index
    %1 = vector.load %arg4[%c0_1, %c0_2] : memref<128x4xf32, #tpu.memory_space<vmem>>, vector<128x4xf32>
    %c0_3 = arith.constant 0 : index
    %c0_4 = arith.constant 0 : index
    %2 = vector.load %arg5[%c0_3, %c0_4] : memref<4x128xf32, #tpu.memory_space<vmem>>, vector<4x128xf32>
    %cst = arith.constant dense<0.000000e+00> : vector<4x4xf32>
    %3 = tpu.matmul %0, %1, %cst {dimension_numbers = #tpu.dot_dimension_numbers<[1], [0], [0], [1], [0, 0, 1, 1], [], []>} : vector<4x128xf32>, vector<128x4xf32>, vector<4x4xf32> -> vector<4x4xf32>
    %cst_5 = arith.constant 3.125000e-02 : f32
    %4 = vector.broadcast %cst_5 : f32 to vector<4x4xf32>
    %5 = arith.mulf %3, %4 : vector<4x4xf32>
    %cst_6 = arith.constant dense<0.000000e+00> : vector<4x128xf32>
    %6 = tpu.matmul %5, %2, %cst_6 {dimension_numbers = #tpu.dot_dimension_numbers<[1], [0], [0], [1], [0, 0, 1, 1], [], []>} : vector<4x4xf32>, vector<4x128xf32>, vector<4x128xf32> -> vector<4x128xf32>
    %7 = arith.subf %0, %6 : vector<4x128xf32>
    %8 = arith.mulf %7, %7 : vector<4x128xf32>
    %cst_7 = arith.constant dense<0.000000e+00> : vector<4x4xf32>
    %9 = tpu.matmul %8, %1, %cst_7 {dimension_numbers = #tpu.dot_dimension_numbers<[1], [0], [0], [1], [0, 0, 1, 1], [], []>} : vector<4x128xf32>, vector<128x4xf32>, vector<4x4xf32> -> vector<4x4xf32>
    %cst_8 = arith.constant 0.0322580636 : f32
    %10 = vector.broadcast %cst_8 : f32 to vector<4x4xf32>
    %11 = arith.mulf %9, %10 : vector<4x4xf32>
    %12 = math.sqrt %11 : vector<4x4xf32>
    %cst_9 = arith.constant 9.99999974E-6 : f32
    %13 = vector.broadcast %cst_9 : f32 to vector<4x4xf32>
    %14 = arith.addf %12, %13 : vector<4x4xf32>
    %cst_10 = arith.constant 1.000000e+00 : f32
    %15 = vector.broadcast %cst_10 : f32 to vector<4x4xf32>
    %16 = arith.divf %15, %14 : vector<4x4xf32>
    %cst_11 = arith.constant dense<0.000000e+00> : vector<4x128xf32>
    %17 = tpu.matmul %16, %2, %cst_11 {dimension_numbers = #tpu.dot_dimension_numbers<[1], [0], [0], [1], [0, 0, 1, 1], [], []>} : vector<4x4xf32>, vector<4x128xf32>, vector<4x128xf32> -> vector<4x128xf32>
    %c0_12 = arith.constant 0 : index
    %c0_13 = arith.constant 0 : index
    %18 = vector.load %arg2[%c0_12, %c0_13] : memref<1x128xf32, #tpu.memory_space<vmem>>, vector<1x128xf32>
    %19 = arith.mulf %7, %17 : vector<4x128xf32>
    %20 = vector.broadcast %18 : vector<1x128xf32> to vector<4x128xf32>
    %21 = arith.mulf %20, %19 : vector<4x128xf32>
    %c0_14 = arith.constant 0 : index
    %c0_15 = arith.constant 0 : index
    %22 = vector.load %arg3[%c0_14, %c0_15] : memref<1x128xf32, #tpu.memory_space<vmem>>, vector<1x128xf32>
    %23 = vector.broadcast %22 : vector<1x128xf32> to vector<4x128xf32>
    %24 = arith.addf %21, %23 : vector<4x128xf32>
    %c0_16 = arith.constant 0 : index
    %c0_17 = arith.constant 0 : index
    %25 = vector.load %arg6[%c0_16, %c0_17] : memref<4x128xf32, #tpu.memory_space<vmem>>, vector<4x128xf32>
    tpu.vector_store %arg6[%c0_16, %c0_17], %24 {strides = array<i32>} : memref<4x128xf32, #tpu.memory_space<vmem>>, vector<4x128xf32>,
    return
  }
  func.func @transform_0(%arg0: i32) -> (i32, i32) {
    %c0_i32 = arith.constant 0 : i32
    %c0_i32_0 = arith.constant 0 : i32
    return %arg0, %c0_i32 : i32, i32
  }
  func.func @transform_1(%arg0: i32) -> (i32, i32) {
    %c0_i32 = arith.constant 0 : i32
    %c0_i32_0 = arith.constant 0 : i32
    %c0_i32_1 = arith.constant 0 : i32
    return %c0_i32, %c0_i32_0 : i32, i32
  }
  func.func @transform_2(%arg0: i32) -> (i32, i32) {
    %c0_i32 = arith.constant 0 : i32
    %c0_i32_0 = arith.constant 0 : i32
    %c0_i32_1 = arith.constant 0 : i32
    return %c0_i32, %c0_i32_0 : i32, i32
  }
  func.func @transform_3(%arg0: i32) -> (i32, i32) {
    %c0_i32 = arith.constant 0 : i32
    %c0_i32_0 = arith.constant 0 : i32
    %c0_i32_1 = arith.constant 0 : i32
    return %c0_i32, %c0_i32_0 : i32, i32
  }
  func.func @transform_4(%arg0: i32) -> (i32, i32) {
    %c0_i32 = arith.constant 0 : i32
    %c0_i32_0 = arith.constant 0 : i32
    %c0_i32_1 = arith.constant 0 : i32
    return %c0_i32, %c0_i32_0 : i32, i32
  }
  func.func @transform_5(%arg0: i32) -> (i32, i32) {
    %c0_i32 = arith.constant 0 : i32
    %c0_i32_0 = arith.constant 0 : i32
    return %arg0, %c0_i32 : i32, i32
  }
}

</mosaic_0001>

<llo_original>
// kernel: tpu_custom_call.1
$region0: #{tpu_custom_call.1}
  #allocation0 [shape = 'u32[]', space=smem, size = 0x4, offset = 0x4, fixed_abs, tag = 'smem constant byte address 0x4 - core index']
  #allocation1 [shape = 'u32[144,128]{1,0:T(1,128)}', space=vmem, size = 0x12000, scoped, tag = 'internal scratch']
  %s0 = inlined_call_operand.vmem [shape: f32[4,128], index: 0, kind: input, shape index: {}]
  %s1 = inlined_call_operand.vmem [shape: f32[1,128], index: 1, kind: input, shape index: {}]
  %s2 = inlined_call_operand.vmem [shape: f32[1,128], index: 2, kind: input, shape index: {}]
  %s3 = inlined_call_operand.vmem [shape: f32[128,4], index: 3, kind: input, shape index: {}]
  %s4 = inlined_call_operand.vmem [shape: f32[4,128], index: 4, kind: input, shape index: {}]
  %s5 = inlined_call_operand.hbm [shape: f32[4,128], index: 5, kind: output, shape index: {}]
  %s6 = sld [smem:[#allocation0]]
  $region30: #{tpu_custom_call.1} parent=0
    _
  %s8 = ssub.s32 1, %s6
  %s9 = scalar_select 0, %s8, %s6
  $region1: #{tpu_custom_call.1} parent=0
    #allocation2 [shape = 'u8[2048]{0}', space=vmem, size = 0x800, scoped, tag = 'output window, operand 0, single buffered']
    #allocation3 [shape = 's32[1]{0}', space=sflag, size = 0x4, scoped, tag = 'scoped memory for tpu_custom_call.1']
    %10 = vsyncpa [#allocation3], 0
    // Predicated region
    $region2: #{tpu_custom_call.1} parent=1 // pred_check
      _
    $region3: #{tpu_custom_call.1} parent=1 // pred_check_branch
      %12 = sbr.rel (0) target = $region5
    $region4: #{tpu_custom_call.1} parent=1 // pred_region
      _
    $region5: #{tpu_custom_call.1} parent=1 // pred_fallthru
      _
    // Predicated region
    $region6: #{tpu_custom_call.1} parent=1 // pred_check
      _
    $region7: #{tpu_custom_call.1} parent=1 // pred_check_branch
      %14 = sbr.rel (0) target = $region9
    $region8: #{tpu_custom_call.1} parent=1 // pred_region
      _
    $region9: #{tpu_custom_call.1} parent=1 // pred_fallthru
      _
    // Predicated region
    $region10: #{tpu_custom_call.1} parent=1 // pred_check
      _
    $region11: #{tpu_custom_call.1} parent=1 // pred_check_branch
      %16 = sbr.rel (0) target = $region13
    $region12: #{tpu_custom_call.1} parent=1 // pred_region
      _
    $region13: #{tpu_custom_call.1} parent=1 // pred_fallthru
      _
    // Predicated region
    $region14: #{tpu_custom_call.1} parent=1 // pred_check
      _
    $region15: #{tpu_custom_call.1} parent=1 // pred_check_branch
      %18 = sbr.rel (0) target = $region17
    $region16: #{tpu_custom_call.1} parent=1 // pred_region
      _
    $region17: #{tpu_custom_call.1} parent=1 // pred_fallthru
      _
    // Predicated region
    $region18: #{tpu_custom_call.1} parent=1 // pred_check
      _
    $region19: #{tpu_custom_call.1} parent=1 // pred_check_branch
      %20 = sbr.rel (0) target = $region21
    $region20: #{tpu_custom_call.1} parent=1 // pred_region
      _
    $region21: #{tpu_custom_call.1} parent=1 // pred_fallthru
      _
    %v21 = vld [vmem:[%s0] sm:$0xf]
    %v22 = vld [vmem:[%s3] sm:$0xff]
    %v23 = vld [vmem:[%s3 + $0x8] sm:$0xff]
    %v24 = vld [vmem:[%s3 + $0x10] sm:$0xff]
    %v25 = vld [vmem:[%s3 + $0x18] sm:$0xff]
    %v26 = vld [vmem:[%s3 + $0x20] sm:$0xff]
    %v27 = vld [vmem:[%s3 + $0x28] sm:$0xff]
    %v28 = vld [vmem:[%s3 + $0x30] sm:$0xff]
    %v29 = vld [vmem:[%s3 + $0x38] sm:$0xff]
    %v30 = vld [vmem:[%s3 + $0x40] sm:$0xff]
    %v31 = vld [vmem:[%s3 + $0x48] sm:$0xff]
    %v32 = vld [vmem:[%s3 + $0x50] sm:$0xff]
    %v33 = vld [vmem:[%s3 + $0x58] sm:$0xff]
    %v34 = vld [vmem:[%s3 + $0x60] sm:$0xff]
    %v35 = vld [vmem:[%s3 + $0x68] sm:$0xff]
    %v36 = vld [vmem:[%s3 + $0x70] sm:$0xff]
    %v37 = vld [vmem:[%s3 + $0x78] sm:$0xff]
    %v38 = vld [vmem:[%s4] sm:$0xf]
    %39 = vmatprep.subr.mxu0 0.0
    %40 = vmatpush1.msra.mxu0 %v37
    %41 = vmatprep.subr.mxu0 0.0
    %42 = vmatpush1.msra.mxu0 %v36
    %43 = vmatprep.subr.mxu0 0.0
    %44 = vmatpush1.msra.mxu0 %v35
    %45 = vmatprep.subr.mxu0 0.0
    %46 = vmatpush1.msra.mxu0 %v34
    %47 = vmatprep.subr.mxu0 0.0
    %48 = vmatpush1.msra.mxu0 %v33
    %49 = vmatprep.subr.mxu0 0.0
    %50 = vmatpush1.msra.mxu0 %v32
    %51 = vmatprep.subr.mxu0 0.0
    %52 = vmatpush1.msra.mxu0 %v31
    %53 = vmatprep.subr.mxu0 0.0
    %54 = vmatpush1.msra.mxu0 %v30
    %55 = vmatprep.subr.mxu0 0.0
    %56 = vmatpush1.msra.mxu0 %v29
    %57 = vmatprep.subr.mxu0 0.0
    %58 = vmatpush1.msra.mxu0 %v28
    %59 = vmatprep.subr.mxu0 0.0
    %60 = vmatpush1.msra.mxu0 %v27
    %61 = vmatprep.subr.mxu0 0.0
    %62 = vmatpush1.msra.mxu0 %v26
    %63 = vmatprep.subr.mxu0 0.0
    %64 = vmatpush1.msra.mxu0 %v25
    %65 = vmatprep.subr.mxu0 0.0
    %66 = vmatpush1.msra.mxu0 %v24
    %67 = vmatprep.subr.mxu0 0.0
    %68 = vmatpush1.msra.mxu0 %v23
    %69 = vmatprep.subr.mxu0 0.0
    %70 = vmatpush1.msra.mxu0 %v22
    %71 = vmatprep.subr.mxu0 0.0
    %72 = vmatpush2.msra.mxu0 0.0
    %73 = vmatprep.subr.mxu0 0.0
    %74 = vmatpush2.msra.mxu0 0.0
    %75 = vmatprep.subr.mxu0 0.0
    %76 = vmatpush2.msra.mxu0 0.0
    %77 = vmatprep.subr.mxu0 0.0
    %78 = vmatpush2.msra.mxu0 0.0
    %79 = vmatprep.subr.mxu0 0.0
    %80 = vmatpush2.msra.mxu0 0.0
    %81 = vmatprep.subr.mxu0 0.0
    %82 = vmatpush2.msra.mxu0 0.0
    %83 = vmatprep.subr.mxu0 0.0
    %84 = vmatpush2.msra.mxu0 0.0
    %85 = vmatprep.subr.mxu0 0.0
    %86 = vmatpush2.msra.mxu0 0.0
    %87 = vmatprep.subr.mxu0 0.0
    %88 = vmatpush2.msra.mxu0 0.0
    %89 = vmatprep.subr.mxu0 0.0
    %90 = vmatpush2.msra.mxu0 0.0
    %91 = vmatprep.subr.mxu0 0.0
    %92 = vmatpush2.msra.mxu0 0.0
    %93 = vmatprep.subr.mxu0 0.0
    %94 = vmatpush2.msra.mxu0 0.0
    %95 = vmatprep.subr.mxu0 0.0
    %96 = vmatpush2.msra.mxu0 0.0
    %97 = vmatprep.subr.mxu0 0.0
    %98 = vmatpush2.msra.mxu0 0.0
    %99 = vmatprep.subr.mxu0 0.0
    %100 = vmatpush2.msra.mxu0 0.0
    %101 = vmatprep.subr.mxu0 0.0
    %102 = vmatpush2.msra.mxu0 0.0
    %103 = vmatprep.mubr.f32.mxu0 0.0
    %104 = vmatmul.mubr.f32.gmra.mxu0 %v21
    %v105 = vpop.f32.mrf.mxu0
    %v106 = vadd.f32 0.0, %v105
    %v107 = vpop.f32.mrf.mxu0
    %108 = vdwg.mxu0
    %v109 = vmul.f32 %v106, 0.03125
    %vm110 = vcmask 31744
    %v112 = vsel %vm110, %v109, 0
    %vm114 = vcmask 1043456
    %v116 = vsel %vm114, %v38, 0
    %118 = vmatprep.subr.mxu0 0.0
    %119 = vmatpush1.msra.mxu0 0.0
    %120 = vmatprep.subr.mxu0 0.0
    %121 = vmatpush1.msra.mxu0 0.0
    %122 = vmatprep.subr.mxu0 0.0
    %123 = vmatpush1.msra.mxu0 0.0
    %124 = vmatprep.subr.mxu0 0.0
    %125 = vmatpush1.msra.mxu0 0.0
    %126 = vmatprep.subr.mxu0 0.0
    %127 = vmatpush1.msra.mxu0 0.0
    %128 = vmatprep.subr.mxu0 0.0
    %129 = vmatpush1.msra.mxu0 0.0
    %130 = vmatprep.subr.mxu0 0.0
    %131 = vmatpush1.msra.mxu0 0.0
    %132 = vmatprep.subr.mxu0 0.0
    %133 = vmatpush1.msra.mxu0 0.0
    %134 = vmatprep.subr.mxu0 0.0
    %135 = vmatpush1.msra.mxu0 0.0
    %136 = vmatprep.subr.mxu0 0.0
    %137 = vmatpush1.msra.mxu0 0.0
    %138 = vmatprep.subr.mxu0 0.0
    %139 = vmatpush1.msra.mxu0 0.0
    %140 = vmatprep.subr.mxu0 0.0
    %141 = vmatpush1.msra.mxu0 0.0
    %142 = vmatprep.subr.mxu0 0.0
    %143 = vmatpush1.msra.mxu0 0.0
    %144 = vmatprep.subr.mxu0 0.0
    %145 = vmatpush1.msra.mxu0 0.0
    %146 = vmatprep.subr.mxu0 0.0
    %147 = vmatpush1.msra.mxu0 0.0
    %148 = vmatprep.subr.mxu0 0.0
    %149 = vmatpush1.msra.mxu0 %v116
    %150 = vmatprep.subr.mxu0 0.0
    %151 = vmatpush2.msra.mxu0 0.0
    %152 = vmatprep.subr.mxu0 0.0
    %153 = vmatpush2.msra.mxu0 0.0
    %154 = vmatprep.subr.mxu0 0.0
    %155 = vmatpush2.msra.mxu0 0.0
    %156 = vmatprep.subr.mxu0 0.0
    %157 = vmatpush2.msra.mxu0 0.0
    %158 = vmatprep.subr.mxu0 0.0
    %159 = vmatpush2.msra.mxu0 0.0
    %160 = vmatprep.subr.mxu0 0.0
    %161 = vmatpush2.msra.mxu0 0.0
    %162 = vmatprep.subr.mxu0 0.0
    %163 = vmatpush2.msra.mxu0 0.0
    %164 = vmatprep.subr.mxu0 0.0
    %165 = vmatpush2.msra.mxu0 0.0
    %166 = vmatprep.subr.mxu0 0.0
    %167 = vmatpush2.msra.mxu0 0.0
    %168 = vmatprep.subr.mxu0 0.0
    %169 = vmatpush2.msra.mxu0 0.0
    %170 = vmatprep.subr.mxu0 0.0
    %171 = vmatpush2.msra.mxu0 0.0
    %172 = vmatprep.subr.mxu0 0.0
    %173 = vmatpush2.msra.mxu0 0.0
    %174 = vmatprep.subr.mxu0 0.0
    %175 = vmatpush2.msra.mxu0 0.0
    %176 = vmatprep.subr.mxu0 0.0
    %177 = vmatpush2.msra.mxu0 0.0
    %178 = vmatprep.subr.mxu0 0.0
    %179 = vmatpush2.msra.mxu0 0.0
    %180 = vmatprep.subr.mxu0 0.0
    %181 = vmatpush2.msra.mxu0 0.0
    %182 = vmatprep.mubr.f32.mxu0 0.0
    %183 = vmatmul.mubr.f32.gmra.mxu0 %v112
    %v184 = vpop.f32.mrf.mxu0
    %v185 = vadd.f32 0.0, %v184
    %v186 = vpop.f32.mrf.mxu0
    %187 = vdwg.mxu0
    %v188 = vsub.f32 %v21, %v185
    %v189 = vmul.f32 %v188, %v188
    %190 = vmatprep.subr.mxu0 0.0
    %191 = vmatpush1.msra.mxu0 %v37
    %192 = vmatprep.subr.mxu0 0.0
    %193 = vmatpush1.msra.mxu0 %v36
    %194 = vmatprep.subr.mxu0 0.0
    %195 = vmatpush1.msra.mxu0 %v35
    %196 = vmatprep.subr.mxu0 0.0
    %197 = vmatpush1.msra.mxu0 %v34
    %198 = vmatprep.subr.mxu0 0.0
    %199 = vmatpush1.msra.mxu0 %v33
    %200 = vmatprep.subr.mxu0 0.0
    %201 = vmatpush1.msra.mxu0 %v32
    %202 = vmatprep.subr.mxu0 0.0
    %203 = vmatpush1.msra.mxu0 %v31
    %204 = vmatprep.subr.mxu0 0.0
    %205 = vmatpush1.msra.mxu0 %v30
    %206 = vmatprep.subr.mxu0 0.0
    %207 = vmatpush1.msra.mxu0 %v29
    %208 = vmatprep.subr.mxu0 0.0
    %209 = vmatpush1.msra.mxu0 %v28
    %210 = vmatprep.subr.mxu0 0.0
    %211 = vmatpush1.msra.mxu0 %v27
    %212 = vmatprep.subr.mxu0 0.0
    %213 = vmatpush1.msra.mxu0 %v26
    %214 = vmatprep.subr.mxu0 0.0
    %215 = vmatpush1.msra.mxu0 %v25
    %216 = vmatprep.subr.mxu0 0.0
    %217 = vmatpush1.msra.mxu0 %v24
    %218 = vmatprep.subr.mxu0 0.0
    %219 = vmatpush1.msra.mxu0 %v23
    %220 = vmatprep.subr.mxu0 0.0
    %221 = vmatpush1.msra.mxu0 %v22
    %222 = vmatprep.subr.mxu0 0.0
    %223 = vmatpush2.msra.mxu0 0.0
    %224 = vmatprep.subr.mxu0 0.0
    %225 = vmatpush2.msra.mxu0 0.0
    %226 = vmatprep.subr.mxu0 0.0
    %227 = vmatpush2.msra.mxu0 0.0
    %228 = vmatprep.subr.mxu0 0.0
    %229 = vmatpush2.msra.mxu0 0.0
    %230 = vmatprep.subr.mxu0 0.0
    %231 = vmatpush2.msra.mxu0 0.0
    %232 = vmatprep.subr.mxu0 0.0
    %233 = vmatpush2.msra.mxu0 0.0
    %234 = vmatprep.subr.mxu0 0.0
    %235 = vmatpush2.msra.mxu0 0.0
    %236 = vmatprep.subr.mxu0 0.0
    %237 = vmatpush2.msra.mxu0 0.0
    %238 = vmatprep.subr.mxu0 0.0
    %239 = vmatpush2.msra.mxu0 0.0
    %240 = vmatprep.subr.mxu0 0.0
    %241 = vmatpush2.msra.mxu0 0.0
    %242 = vmatprep.subr.mxu0 0.0
    %243 = vmatpush2.msra.mxu0 0.0
    %244 = vmatprep.subr.mxu0 0.0
    %245 = vmatpush2.msra.mxu0 0.0
    %246 = vmatprep.subr.mxu0 0.0
    %247 = vmatpush2.msra.mxu0 0.0
    %248 = vmatprep.subr.mxu0 0.0
    %249 = vmatpush2.msra.mxu0 0.0
    %250 = vmatprep.subr.mxu0 0.0
    %251 = vmatpush2.msra.mxu0 0.0
    %252 = vmatprep.subr.mxu0 0.0
    %253 = vmatpush2.msra.mxu0 0.0
    %254 = vmatprep.mubr.f32.mxu0 0.0
    %255 = vmatmul.mubr.f32.gmra.mxu0 %v189
    %v256 = vpop.f32.mrf.mxu0
    %v257 = vadd.f32 0.0, %v256
    %v258 = vpop.f32.mrf.mxu0
    %259 = vdwg.mxu0
    %v260 = vmul.f32 %v257, 0.032258064
    %v261 = vrsqrt.pop %v260
    %v262 = vmul.f32 %v260, %v261
    %vm263 = vcmp.eq.f32.partialorder %v260, inf
    %v264 = vsel %vm263, %v260, %v262
    %vm265 = vcmp.eq.f32.partialorder %v260, 0.0
    %v266 = vand.u32 %v260, 2147483648
    %v267 = vsel %vm265, %v266, %v264
    %v268 = vadd.f32 %v267, 1e-05
    %v269 = vrcp.pop %v268
    %v270 = vmul.f32 1.0, %v269
    %v272 = vsel %vm110, %v270, 0
    %274 = vmatprep.subr.mxu0 0.0
    %275 = vmatpush1.msra.mxu0 0.0
    %276 = vmatprep.subr.mxu0 0.0
    %277 = vmatpush1.msra.mxu0 0.0
    %278 = vmatprep.subr.mxu0 0.0
    %279 = vmatpush1.msra.mxu0 0.0
    %280 = vmatprep.subr.mxu0 0.0
    %281 = vmatpush1.msra.mxu0 0.0
    %282 = vmatprep.subr.mxu0 0.0
    %283 = vmatpush1.msra.mxu0 0.0
    %284 = vmatprep.subr.mxu0 0.0
    %285 = vmatpush1.msra.mxu0 0.0
    %286 = vmatprep.subr.mxu0 0.0
    %287 = vmatpush1.msra.mxu0 0.0
    %288 = vmatprep.subr.mxu0 0.0
    %289 = vmatpush1.msra.mxu0 0.0
    %290 = vmatprep.subr.mxu0 0.0
    %291 = vmatpush1.msra.mxu0 0.0
    %292 = vmatprep.subr.mxu0 0.0
    %293 = vmatpush1.msra.mxu0 0.0
    %294 = vmatprep.subr.mxu0 0.0
    %295 = vmatpush1.msra.mxu0 0.0
    %296 = vmatprep.subr.mxu0 0.0
    %297 = vmatpush1.msra.mxu0 0.0
    %298 = vmatprep.subr.mxu0 0.0
    %299 = vmatpush1.msra.mxu0 0.0
    %300 = vmatprep.subr.mxu0 0.0
    %301 = vmatpush1.msra.mxu0 0.0
    %302 = vmatprep.subr.mxu0 0.0
    %303 = vmatpush1.msra.mxu0 0.0
    %304 = vmatprep.subr.mxu0 0.0
    %305 = vmatpush1.msra.mxu0 %v116
    %306 = vmatprep.subr.mxu0 0.0
    %307 = vmatpush2.msra.mxu0 0.0
    %308 = vmatprep.subr.mxu0 0.0
    %309 = vmatpush2.msra.mxu0 0.0
    %310 = vmatprep.subr.mxu0 0.0
    %311 = vmatpush2.msra.mxu0 0.0
    %312 = vmatprep.subr.mxu0 0.0
    %313 = vmatpush2.msra.mxu0 0.0
    %314 = vmatprep.subr.mxu0 0.0
    %315 = vmatpush2.msra.mxu0 0.0
    %316 = vmatprep.subr.mxu0 0.0
    %317 = vmatpush2.msra.mxu0 0.0
    %318 = vmatprep.subr.mxu0 0.0
    %319 = vmatpush2.msra.mxu0 0.0
    %320 = vmatprep.subr.mxu0 0.0
    %321 = vmatpush2.msra.mxu0 0.0
    %322 = vmatprep.subr.mxu0 0.0
    %323 = vmatpush2.msra.mxu0 0.0
    %324 = vmatprep.subr.mxu0 0.0
    %325 = vmatpush2.msra.mxu0 0.0
    %326 = vmatprep.subr.mxu0 0.0
    %327 = vmatpush2.msra.mxu0 0.0
    %328 = vmatprep.subr.mxu0 0.0
    %329 = vmatpush2.msra.mxu0 0.0
    %330 = vmatprep.subr.mxu0 0.0
    %331 = vmatpush2.msra.mxu0 0.0
    %332 = vmatprep.subr.mxu0 0.0
    %333 = vmatpush2.msra.mxu0 0.0
    %334 = vmatprep.subr.mxu0 0.0
    %335 = vmatpush2.msra.mxu0 0.0
    %336 = vmatprep.subr.mxu0 0.0
    %337 = vmatpush2.msra.mxu0 0.0
    %338 = vmatprep.mubr.f32.mxu0 0.0
    %339 = vmatmul.mubr.f32.gmra.mxu0 %v272
    %v340 = vpop.f32.mrf.mxu0
    %v341 = vadd.f32 0.0, %v340
    %v342 = vpop.f32.mrf.mxu0
    %343 = vdwg.mxu0
    %v344 = vld [vmem:[%s1] sm:$0x1]
    %v345 = vmul.f32 %v188, %v341
    %v347 = vlaneseq
    %v348 = vshrl.u32 %v347, 7
    %v349 = vsub.s32 0, %v348
    %v350 = vrot.slane %v344, %v349
    %v352 = vmul.f32 %v350, %v345
    %v353 = vld [vmem:[%s2] sm:$0x1]
    %v355 = vlaneseq
    %v356 = vshrl.u32 %v355, 7
    %v357 = vsub.s32 0, %v356
    %v358 = vrot.slane %v353, %v357
    %v360 = vadd.f32 %v352, %v358
    %361 = vst [vmem:[#allocation2] sm:$0xf] %v360
    // Predicated region
    $region22: #{tpu_custom_call.1} parent=1 // pred_check
      _
    $region23: #{tpu_custom_call.1} parent=1 // pred_check_branch
      %363 = sbr.rel (0) target = $region25
    $region24: #{tpu_custom_call.1} parent=1 // pred_region
      %s365 = ssub.s32 64, 64
      %366 = vsyncadd [#allocation3], %s365
      %s368 = sshll.u32 [#allocation2], 4
      %s369 = int_to_ptr.vmem [resolvable:$true] %s368
      %371 = dma.vmem_to_hbm [thread:$0]  %s369, 64, %s5, [#allocation3]
    $region25: #{tpu_custom_call.1} parent=1 // pred_fallthru
      _
    // Predicated region
    $region26: #{tpu_custom_call.1} parent=1 // pred_check
      _
    $region27: #{tpu_custom_call.1} parent=1 // pred_check_branch
      %373 = sbr.rel (0) target = $region29
    $region28: #{tpu_custom_call.1} parent=1 // pred_region
      %374 = dma.done [#allocation3], 64
    $region29: #{tpu_custom_call.1} parent=1 // pred_fallthru
      _
    %375 = vsyncpa [#allocation3], 1

</llo_original>
